<compile_context>
chip_gen: v5e
topology: v5e:2x2
jax: 0.10.0
libtpu: 0.0.40
codegen_flags: <defaults>
</compile_context>

<pallas_src>
import math
import jax
import jax.numpy as jnp
from jax.experimental import pallas as pl
from jax.experimental.pallas import tpu as pltpu


def mlp_kernel(x_ref,
               w1_ref, b1_ref,
               w2_ref, b2_ref,
               w3_ref, b3_ref,
               w4_ref, b4_ref,
               o_ref):
    # x_ref: (5, batch_tile)  -- batch on the lane axis.
    # wN_ref: (out, in), bN_ref: (out, 1)  -- broadcast along the lane (batch) axis.
    x = x_ref[...]
    h = jnp.tanh(jnp.dot(w1_ref[...], x, preferred_element_type=jnp.float32) + b1_ref[...])
    h = jnp.tanh(jnp.dot(w2_ref[...], h, preferred_element_type=jnp.float32) + b2_ref[...])
    h = jnp.tanh(jnp.dot(w3_ref[...], h, preferred_element_type=jnp.float32) + b3_ref[...])
    o = jnp.dot(w4_ref[...], h, preferred_element_type=jnp.float32) + b4_ref[...]
    o_ref[...] = o.astype(o_ref.dtype)


def mlp_forward(x, params, *, batch_tile=512):
    """x: (B, 5) float32 (PyTorch row-major layout).

    params: w1..w4 as (out, in) [torch nn.Linear.weight layout], b1..b4 as (out, 1).
    Returns (B, 4) float32.
    """
    B, D_in = x.shape
    assert D_in == 5

    w1, b1 = params["w1"], params["b1"]
    w2, b2 = params["w2"], params["b2"]
    w3, b3 = params["w3"], params["b3"]
    w4, b4 = params["w4"], params["b4"]
    D_out = w4.shape[0]

    # Lane-dense tiling: batch lives on the 128-lane axis, so the tile must be a
    # multiple of 128. Don't tile wider than the (128-rounded) batch itself.
    bt = max(128, (int(batch_tile) // 128) * 128)
    bt = min(bt, ((B + 127) // 128) * 128)
    b_pad = pl.cdiv(B, bt) * bt

    # Transpose to (features, batch) and zero-pad the batch tail (padding columns
    # produce tanh(b)=0 garbage that is sliced off below; no NaNs, no masking needed).
    x_t = x.T
    if b_pad != B:
        x_t = jnp.pad(x_t, ((0, 0), (0, b_pad - B)))

    def param_spec(shape):
        # Constant index_map -> DMA'd once, resident in VMEM across all grid steps.
        # (pipeline_mode=pl.Buffered(1) would drop the second buffer; skipped, ~3 KB total.)
        return pl.BlockSpec(shape, lambda i: (0, 0))

    grid = (b_pad // bt,)
    out_t = pl.pallas_call(
        mlp_kernel,
        out_shape=jax.ShapeDtypeStruct((D_out, b_pad), x.dtype),
        grid_spec=pltpu.PrefetchScalarGridSpec(
            num_scalar_prefetch=0,
            grid=grid,
            in_specs=[
                pl.BlockSpec((D_in, bt), lambda i: (0, i)),  # x tile: batch on lanes
                param_spec(w1.shape), param_spec(b1.shape),
                param_spec(w2.shape), param_spec(b2.shape),
                param_spec(w3.shape), param_spec(b3.shape),
                param_spec(w4.shape), param_spec(b4.shape),
            ],
            out_specs=pl.BlockSpec((D_out, bt), lambda i: (0, i)),
        ),
        compiler_params=pltpu.CompilerParams(
            dimension_semantics=("parallel",),  # shards batch tiles across TCs on v7x
        ),
    )(x_t, w1, b1, w2, b2, w3, b3, w4, b4)

    # Layout plumbing back to PyTorch's (batch, features).
    return out_t[:, :B].T


def xavier_uniform(key, fan_out, fan_in, dtype=jnp.float32):
    # Matches torch.nn.init.xavier_uniform_ on a (fan_out, fan_in) Linear weight.
    bound = math.sqrt(6.0 / (fan_in + fan_out))
    return jax.random.uniform(key, (fan_out, fan_in), dtype=dtype,
                              minval=-bound, maxval=bound)


def init_params(key):
    k1, k2, k3, k4 = jax.random.split(key, 4)
    dims = [(5, 32), (32, 16), (16, 8), (8, 4)]   # (in, out) per layer
    keys = [k1, k2, k3, k4]
    params = {}
    for idx, ((din, dout), k) in enumerate(zip(dims, keys), start=1):
        params[f"w{idx}"] = xavier_uniform(k, dout, din)              # (out, in)
        params[f"b{idx}"] = jnp.zeros((dout, 1), dtype=jnp.float32)   # zeros_ init
    return params


def mlp_reference(x, params):
    # Plain row-major reference, identical math to the PyTorch module.
    h = jnp.tanh(x @ params["w1"].T + params["b1"][:, 0])
    h = jnp.tanh(h @ params["w2"].T + params["b2"][:, 0])
    h = jnp.tanh(h @ params["w3"].T + params["b3"][:, 0])
    return h @ params["w4"].T + params["b4"][:, 0]


if __name__ == "__main__":
    key = jax.random.PRNGKey(0)
    pkey, xkey = jax.random.split(key)
    params = init_params(pkey)

    # Non-multiple batch to exercise the padded tail; batch_tile=128 gives a 3-step
    # grid (megacore-shardable on v7x) while staying small.
    B = 300
    x = jax.random.normal(xkey, (B, 5), dtype=jnp.float32)

    out = mlp_forward(x, params, batch_tile=128)
    out = jax.block_until_ready(out)

    ref = mlp_reference(x, params)
    assert out.shape == (B, 4)
    assert jnp.allclose(out, ref, atol=1e-5, rtol=1e-5)

    print("KERNEL_OK")
</pallas_src>

<mosaic_0001>
module attributes {stable_mosaic.version = 11 : i64} {
  func.func @mlp_kernel(%arg0: i32, %arg1: memref<5x128xf32, #tpu.memory_space<vmem>>, %arg2: memref<32x5xf32, #tpu.memory_space<vmem>>, %arg3: memref<32x1xf32, #tpu.memory_space<vmem>>, %arg4: memref<16x32xf32, #tpu.memory_space<vmem>>, %arg5: memref<16x1xf32, #tpu.memory_space<vmem>>, %arg6: memref<8x16xf32, #tpu.memory_space<vmem>>, %arg7: memref<8x1xf32, #tpu.memory_space<vmem>>, %arg8: memref<4x8xf32, #tpu.memory_space<vmem>>, %arg9: memref<4x1xf32, #tpu.memory_space<vmem>>, %arg10: memref<4x128xf32, #tpu.memory_space<vmem>>) attributes {dimension_semantics = [#tpu.dimension_semantics<parallel>], iteration_bounds = array<i64: 3>, scalar_prefetch = 0 : i64, scratch_operands = 0 : i64, tpu.core_type = #tpu.core_type<tc>, window_params = [{transform_indices = @transform_0, window_bounds = array<i64: 5, 128>}, {pipeline_mode = #tpu.pipeline_mode<synchronous>, transform_indices = @transform_1, window_bounds = array<i64: 32, 5>}, {pipeline_mode = #tpu.pipeline_mode<synchronous>, transform_indices = @transform_2, window_bounds = array<i64: 32, 1>}, {pipeline_mode = #tpu.pipeline_mode<synchronous>, transform_indices = @transform_3, window_bounds = array<i64: 16, 32>}, {pipeline_mode = #tpu.pipeline_mode<synchronous>, transform_indices = @transform_4, window_bounds = array<i64: 16, 1>}, {pipeline_mode = #tpu.pipeline_mode<synchronous>, transform_indices = @transform_5, window_bounds = array<i64: 8, 16>}, {pipeline_mode = #tpu.pipeline_mode<synchronous>, transform_indices = @transform_6, window_bounds = array<i64: 8, 1>}, {pipeline_mode = #tpu.pipeline_mode<synchronous>, transform_indices = @transform_7, window_bounds = array<i64: 4, 8>}, {pipeline_mode = #tpu.pipeline_mode<synchronous>, transform_indices = @transform_8, window_bounds = array<i64: 4, 1>}, {transform_indices = @transform_9, window_bounds = array<i64: 4, 128>}]} {
    %c0 = arith.constant 0 : index
    %c0_0 = arith.constant 0 : index
    %0 = vector.load %arg1[%c0, %c0_0] : memref<5x128xf32, #tpu.memory_space<vmem>>, vector<5x128xf32>
    %c0_1 = arith.constant 0 : index
    %c0_2 = arith.constant 0 : index
    %1 = vector.load %arg2[%c0_1, %c0_2] : memref<32x5xf32, #tpu.memory_space<vmem>>, vector<32x5xf32>
    %cst = arith.constant dense<0.000000e+00> : vector<32x128xf32>
    %2 = tpu.matmul %1, %0, %cst {dimension_numbers = #tpu.dot_dimension_numbers<[1], [0], [0], [1], [0, 0, 1, 1], [], []>} : vector<32x5xf32>, vector<5x128xf32>, vector<32x128xf32> -> vector<32x128xf32>
    %c0_3 = arith.constant 0 : index
    %c0_4 = arith.constant 0 : index
    %3 = vector.load %arg3[%c0_3, %c0_4] : memref<32x1xf32, #tpu.memory_space<vmem>>, vector<32x1xf32>
    %4 = vector.broadcast %3 : vector<32x1xf32> to vector<32x128xf32>
    %5 = arith.addf %2, %4 : vector<32x128xf32>
    %6 = math.tanh %5 : vector<32x128xf32>
    %c0_5 = arith.constant 0 : index
    %c0_6 = arith.constant 0 : index
    %7 = vector.load %arg4[%c0_5, %c0_6] : memref<16x32xf32, #tpu.memory_space<vmem>>, vector<16x32xf32>
    %cst_7 = arith.constant dense<0.000000e+00> : vector<16x128xf32>
    %8 = tpu.matmul %7, %6, %cst_7 {dimension_numbers = #tpu.dot_dimension_numbers<[1], [0], [0], [1], [0, 0, 1, 1], [], []>} : vector<16x32xf32>, vector<32x128xf32>, vector<16x128xf32> -> vector<16x128xf32>
    %c0_8 = arith.constant 0 : index
    %c0_9 = arith.constant 0 : index
    %9 = vector.load %arg5[%c0_8, %c0_9] : memref<16x1xf32, #tpu.memory_space<vmem>>, vector<16x1xf32>
    %10 = vector.broadcast %9 : vector<16x1xf32> to vector<16x128xf32>
    %11 = arith.addf %8, %10 : vector<16x128xf32>
    %12 = math.tanh %11 : vector<16x128xf32>
    %c0_10 = arith.constant 0 : index
    %c0_11 = arith.constant 0 : index
    %13 = vector.load %arg6[%c0_10, %c0_11] : memref<8x16xf32, #tpu.memory_space<vmem>>, vector<8x16xf32>
    %cst_12 = arith.constant dense<0.000000e+00> : vector<8x128xf32>
    %14 = tpu.matmul %13, %12, %cst_12 {dimension_numbers = #tpu.dot_dimension_numbers<[1], [0], [0], [1], [0, 0, 1, 1], [], []>} : vector<8x16xf32>, vector<16x128xf32>, vector<8x128xf32> -> vector<8x128xf32>
    %c0_13 = arith.constant 0 : index
    %c0_14 = arith.constant 0 : index
    %15 = vector.load %arg7[%c0_13, %c0_14] : memref<8x1xf32, #tpu.memory_space<vmem>>, vector<8x1xf32>
    %16 = vector.broadcast %15 : vector<8x1xf32> to vector<8x128xf32>
    %17 = arith.addf %14, %16 : vector<8x128xf32>
    %18 = math.tanh %17 : vector<8x128xf32>
    %c0_15 = arith.constant 0 : index
    %c0_16 = arith.constant 0 : index
    %19 = vector.load %arg8[%c0_15, %c0_16] : memref<4x8xf32, #tpu.memory_space<vmem>>, vector<4x8xf32>
    %cst_17 = arith.constant dense<0.000000e+00> : vector<4x128xf32>
    %20 = tpu.matmul %19, %18, %cst_17 {dimension_numbers = #tpu.dot_dimension_numbers<[1], [0], [0], [1], [0, 0, 1, 1], [], []>} : vector<4x8xf32>, vector<8x128xf32>, vector<4x128xf32> -> vector<4x128xf32>
    %c0_18 = arith.constant 0 : index
    %c0_19 = arith.constant 0 : index
    %21 = vector.load %arg9[%c0_18, %c0_19] : memref<4x1xf32, #tpu.memory_space<vmem>>, vector<4x1xf32>
    %22 = vector.broadcast %21 : vector<4x1xf32> to vector<4x128xf32>
    %23 = arith.addf %20, %22 : vector<4x128xf32>
    %c0_20 = arith.constant 0 : index
    %c0_21 = arith.constant 0 : index
    %24 = vector.load %arg10[%c0_20, %c0_21] : memref<4x128xf32, #tpu.memory_space<vmem>>, vector<4x128xf32>
    tpu.vector_store %arg10[%c0_20, %c0_21], %23 {strides = array<i32>} : memref<4x128xf32, #tpu.memory_space<vmem>>, vector<4x128xf32>,
    return
  }
  func.func @transform_0(%arg0: i32) -> (i32, i32) {
    %c0_i32 = arith.constant 0 : i32
    %c0_i32_0 = arith.constant 0 : i32
    return %c0_i32, %arg0 : i32, i32
  }
  func.func @transform_1(%arg0: i32) -> (i32, i32) {
    %c0_i32 = arith.constant 0 : i32
    %c0_i32_0 = arith.constant 0 : i32
    %c0_i32_1 = arith.constant 0 : i32
    return %c0_i32, %c0_i32_0 : i32, i32
  }
  func.func @transform_2(%arg0: i32) -> (i32, i32) {
    %c0_i32 = arith.constant 0 : i32
    %c0_i32_0 = arith.constant 0 : i32
    %c0_i32_1 = arith.constant 0 : i32
    return %c0_i32, %c0_i32_0 : i32, i32
  }
  func.func @transform_3(%arg0: i32) -> (i32, i32) {
    %c0_i32 = arith.constant 0 : i32
    %c0_i32_0 = arith.constant 0 : i32
    %c0_i32_1 = arith.constant 0 : i32
    return %c0_i32, %c0_i32_0 : i32, i32
  }
  func.func @transform_4(%arg0: i32) -> (i32, i32) {
    %c0_i32 = arith.constant 0 : i32
    %c0_i32_0 = arith.constant 0 : i32
    %c0_i32_1 = arith.constant 0 : i32
    return %c0_i32, %c0_i32_0 : i32, i32
  }
  func.func @transform_5(%arg0: i32) -> (i32, i32) {
    %c0_i32 = arith.constant 0 : i32
    %c0_i32_0 = arith.constant 0 : i32
    %c0_i32_1 = arith.constant 0 : i32
    return %c0_i32, %c0_i32_0 : i32, i32
  }
  func.func @transform_6(%arg0: i32) -> (i32, i32) {
    %c0_i32 = arith.constant 0 : i32
    %c0_i32_0 = arith.constant 0 : i32
    %c0_i32_1 = arith.constant 0 : i32
    return %c0_i32, %c0_i32_0 : i32, i32
  }
  func.func @transform_7(%arg0: i32) -> (i32, i32) {
    %c0_i32 = arith.constant 0 : i32
    %c0_i32_0 = arith.constant 0 : i32
    %c0_i32_1 = arith.constant 0 : i32
    return %c0_i32, %c0_i32_0 : i32, i32
  }
  func.func @transform_8(%arg0: i32) -> (i32, i32) {
    %c0_i32 = arith.constant 0 : i32
    %c0_i32_0 = arith.constant 0 : i32
    %c0_i32_1 = arith.constant 0 : i32
    return %c0_i32, %c0_i32_0 : i32, i32
  }
  func.func @transform_9(%arg0: i32) -> (i32, i32) {
    %c0_i32 = arith.constant 0 : i32
    %c0_i32_0 = arith.constant 0 : i32
    return %c0_i32, %arg0 : i32, i32
  }
}

</mosaic_0001>

<llo_original>
// kernel: tpu_custom_call.1
$region0: #{tpu_custom_call.1}
  #allocation0 [shape = 'u32[]', space=smem, size = 0x4, offset = 0x4, fixed_abs, tag = 'smem constant byte address 0x4 - core index']
  #allocation1 [shape = 'u32[72,128]{1,0:T(1,128)}', space=vmem, size = 0x9000, scoped, tag = 'internal scratch']
  %s0 = inlined_call_operand.vmem [shape: f32[5,384], index: 0, kind: input, shape index: {}]
  %s1 = inlined_call_operand.vmem [shape: f32[32,5], index: 1, kind: input, shape index: {}]
  %s2 = inlined_call_operand.vmem [shape: f32[32,1], index: 2, kind: input, shape index: {}]
  %s3 = inlined_call_operand.vmem [shape: f32[16,32], index: 3, kind: input, shape index: {}]
  %s4 = inlined_call_operand.vmem [shape: f32[16,1], index: 4, kind: input, shape index: {}]
  %s5 = inlined_call_operand.vmem [shape: f32[8,16], index: 5, kind: input, shape index: {}]
  %s6 = inlined_call_operand.vmem [shape: f32[8,1], index: 6, kind: input, shape index: {}]
  %s7 = inlined_call_operand.vmem [shape: f32[4,8], index: 7, kind: input, shape index: {}]
  %s8 = inlined_call_operand.vmem [shape: f32[4,1], index: 8, kind: input, shape index: {}]
  %s9 = inlined_call_operand.hbm [shape: f32[4,384], index: 9, kind: output, shape index: {}]
  %s10 = sld [smem:[#allocation0]]
  $region69: #{tpu_custom_call.1} parent=0
    _
  %s12 = ssub.s32 1, %s10
  %s13 = scalar_select 0, %s12, %s10
  $region1: #{tpu_custom_call.1} parent=0
    #allocation2 [shape = 'u8[4096]{0}', space=vmem, size = 0x1000, scoped, tag = 'output window, operand 0']
    #allocation3 [shape = 's32[2]{0}', space=sflag, size = 0x8, scoped, tag = 'scoped memory for tpu_custom_call.1']
    %14 = vsyncpa [#allocation3], 0
    %s15 = scalar_lea.sflag [#allocation3], 1
    %16 = vsyncpa %s15, 0
    loop: start=0, step=1, limit=5
    $region2: #{tpu_custom_call.1} parent=1 // loop_pre_header
      _
    $region3: #{tpu_custom_call.1} parent=1 // loop_header
      %s18 = sphi 0, %s22
      %p19 = scmp.ge.s32.totalorder %s18, 5
      %s28 = sphi 0, %s30
      %s31 = sphi 0, %s28
      %s32 = sphi 0, %s31
      %s48 = sphi 0, %s32
      %s52 = sphi 0, %s52
      %s54 = sphi 0, %s52
      %s55 = sphi 0, %s54
      %s69 = sphi 0, %s55
      %s73 = sphi 0, %s73
      %s75 = sphi 0, %s73
      %s76 = sphi 0, %s75
      %s90 = sphi 0, %s76
      %s94 = sphi 0, %s94
      %s96 = sphi 0, %s94
      %s97 = sphi 0, %s96
      %s111 = sphi 0, %s97
      %s115 = sphi 0, %s115
      %s117 = sphi 0, %s115
      %s118 = sphi 0, %s117
      %s132 = sphi 0, %s118
      %s136 = sphi 0, %s136
      %s138 = sphi 0, %s136
      %s139 = sphi 0, %s138
      %s153 = sphi 0, %s139
      %s157 = sphi 0, %s157
      %s159 = sphi 0, %s157
      %s160 = sphi 0, %s159
      %s174 = sphi 0, %s160
      %s178 = sphi 0, %s178
      %s180 = sphi 0, %s178
      %s181 = sphi 0, %s180
      %s195 = sphi 0, %s181
      %s199 = sphi 0, %s199
      %s201 = sphi 0, %s199
      %s202 = sphi 0, %s201
      %s216 = sphi 0, %s202
      %s222 = sphi 0, %s224
      %s225 = sphi 0, %s222
      %s226 = sphi 0, %s225
      %s242 = sphi 0, %s226
    $region4: #{tpu_custom_call.1} parent=1 // loop_header_branch
      %21 = sbr.rel (%p19) target = $region8
    $region5: #{tpu_custom_call.1} parent=1 // loop_body
      %s23 = ssub.s32 %s18, 1
      %s24 = ssub.s32 %s18, 2
      %s25 = sadd.s32 %s18, 1
      %s26 = ssub.s32 %s18, %s25
      %p27 = scmp.eq.s32.totalorder %s26, 0
      %s29 = sadd.s32 %s28, 1
      %s30 = scalar_select %p27, %s28, %s29
      %p33 = pneg %p27
      %p34 = scmp.eq.s32.totalorder %s18, 2
      %p35 = por %p33, %p34
      %p36 = scmp.ne.s32.totalorder %s28, %s31
      %p37 = scmp.eq.s32.totalorder %s18, 0
      %p38 = por %p36, %p37
      %p39 = scmp.ne.s32.totalorder %s28, %s31
      %p40 = scmp.eq.s32.totalorder %s23, 2
      %p41 = por %p39, %p40
      %p42 = scmp.ne.s32.totalorder %s31, %s32
      %p43 = scmp.eq.s32.totalorder %s23, 0
      %p44 = por %p42, %p43
      %p45 = scmp.ne.s32.totalorder %s31, %s32
      %p46 = scmp.eq.s32.totalorder %s24, 2
      %p47 = por %p45, %p46
      %p49 = scmp.ne.s32.totalorder %s32, %s48
      %p50 = scmp.eq.s32.totalorder %s24, 0
      %p51 = por %p49, %p50
      %s53 = sadd.s32 %s52, 1
      %p56 = scmp.eq.s32.totalorder %s18, 2
      %p57 = scmp.ne.s32.totalorder %s52, %s54
      %p58 = scmp.eq.s32.totalorder %s18, 0
      %p59 = por %p57, %p58
      %p60 = scmp.ne.s32.totalorder %s52, %s54
      %p61 = scmp.eq.s32.totalorder %s23, 2
      %p62 = por %p60, %p61
      %p63 = scmp.ne.s32.totalorder %s54, %s55
      %p64 = scmp.eq.s32.totalorder %s23, 0
      %p65 = por %p63, %p64
      %p66 = scmp.ne.s32.totalorder %s54, %s55
      %p67 = scmp.eq.s32.totalorder %s24, 2
      %p68 = por %p66, %p67
      %p70 = scmp.ne.s32.totalorder %s55, %s69
      %p71 = scmp.eq.s32.totalorder %s24, 0
      %p72 = por %p70, %p71
      %s74 = sadd.s32 %s73, 1
      %p77 = scmp.eq.s32.totalorder %s18, 2
      %p78 = scmp.ne.s32.totalorder %s73, %s75
      %p79 = scmp.eq.s32.totalorder %s18, 0
      %p80 = por %p78, %p79
      %p81 = scmp.ne.s32.totalorder %s73, %s75
      %p82 = scmp.eq.s32.totalorder %s23, 2
      %p83 = por %p81, %p82
      %p84 = scmp.ne.s32.totalorder %s75, %s76
      %p85 = scmp.eq.s32.totalorder %s23, 0
      %p86 = por %p84, %p85
      %p87 = scmp.ne.s32.totalorder %s75, %s76
      %p88 = scmp.eq.s32.totalorder %s24, 2
      %p89 = por %p87, %p88
      %p91 = scmp.ne.s32.totalorder %s76, %s90
      %p92 = scmp.eq.s32.totalorder %s24, 0
      %p93 = por %p91, %p92
      %s95 = sadd.s32 %s94, 1
      %p98 = scmp.eq.s32.totalorder %s18, 2
      %p99 = scmp.ne.s32.totalorder %s94, %s96
      %p100 = scmp.eq.s32.totalorder %s18, 0
      %p101 = por %p99, %p100
      %p102 = scmp.ne.s32.totalorder %s94, %s96
      %p103 = scmp.eq.s32.totalorder %s23, 2
      %p104 = por %p102, %p103
      %p105 = scmp.ne.s32.totalorder %s96, %s97
      %p106 = scmp.eq.s32.totalorder %s23, 0
      %p107 = por %p105, %p106
      %p108 = scmp.ne.s32.totalorder %s96, %s97
      %p109 = scmp.eq.s32.totalorder %s24, 2
      %p110 = por %p108, %p109
      %p112 = scmp.ne.s32.totalorder %s97, %s111
      %p113 = scmp.eq.s32.totalorder %s24, 0
      %p114 = por %p112, %p113
      %s116 = sadd.s32 %s115, 1
      %p119 = scmp.eq.s32.totalorder %s18, 2
      %p120 = scmp.ne.s32.totalorder %s115, %s117
      %p121 = scmp.eq.s32.totalorder %s18, 0
      %p122 = por %p120, %p121
      %p123 = scmp.ne.s32.totalorder %s115, %s117
      %p124 = scmp.eq.s32.totalorder %s23, 2
      %p125 = por %p123, %p124
      %p126 = scmp.ne.s32.totalorder %s117, %s118
      %p127 = scmp.eq.s32.totalorder %s23, 0
      %p128 = por %p126, %p127
      %p129 = scmp.ne.s32.totalorder %s117, %s118
      %p130 = scmp.eq.s32.totalorder %s24, 2
      %p131 = por %p129, %p130
      %p133 = scmp.ne.s32.totalorder %s118, %s132
      %p134 = scmp.eq.s32.totalorder %s24, 0
      %p135 = por %p133, %p134
      %s137 = sadd.s32 %s136, 1
      %p140 = scmp.eq.s32.totalorder %s18, 2
      %p141 = scmp.ne.s32.totalorder %s136, %s138
      %p142 = scmp.eq.s32.totalorder %s18, 0
      %p143 = por %p141, %p142
      %p144 = scmp.ne.s32.totalorder %s136, %s138
      %p145 = scmp.eq.s32.totalorder %s23, 2
      %p146 = por %p144, %p145
      %p147 = scmp.ne.s32.totalorder %s138, %s139
      %p148 = scmp.eq.s32.totalorder %s23, 0
      %p149 = por %p147, %p148
      %p150 = scmp.ne.s32.totalorder %s138, %s139
      %p151 = scmp.eq.s32.totalorder %s24, 2
      %p152 = por %p150, %p151
      %p154 = scmp.ne.s32.totalorder %s139, %s153
      %p155 = scmp.eq.s32.totalorder %s24, 0
      %p156 = por %p154, %p155
      %s158 = sadd.s32 %s157, 1
      %p161 = scmp.eq.s32.totalorder %s18, 2
      %p162 = scmp.ne.s32.totalorder %s157, %s159
      %p163 = scmp.eq.s32.totalorder %s18, 0
      %p164 = por %p162, %p163
      %p165 = scmp.ne.s32.totalorder %s157, %s159
      %p166 = scmp.eq.s32.totalorder %s23, 2
      %p167 = por %p165, %p166
      %p168 = scmp.ne.s32.totalorder %s159, %s160
      %p169 = scmp.eq.s32.totalorder %s23, 0
      %p170 = por %p168, %p169
      %p171 = scmp.ne.s32.totalorder %s159, %s160
      %p172 = scmp.eq.s32.totalorder %s24, 2
      %p173 = por %p171, %p172
      %p175 = scmp.ne.s32.totalorder %s160, %s174
      %p176 = scmp.eq.s32.totalorder %s24, 0
      %p177 = por %p175, %p176
      %s179 = sadd.s32 %s178, 1
      %p182 = scmp.eq.s32.totalorder %s18, 2
      %p183 = scmp.ne.s32.totalorder %s178, %s180
      %p184 = scmp.eq.s32.totalorder %s18, 0
      %p185 = por %p183, %p184
      %p186 = scmp.ne.s32.totalorder %s178, %s180
      %p187 = scmp.eq.s32.totalorder %s23, 2
      %p188 = por %p186, %p187
      %p189 = scmp.ne.s32.totalorder %s180, %s181
      %p190 = scmp.eq.s32.totalorder %s23, 0
      %p191 = por %p189, %p190
      %p192 = scmp.ne.s32.totalorder %s180, %s181
      %p193 = scmp.eq.s32.totalorder %s24, 2
      %p194 = por %p192, %p193
      %p196 = scmp.ne.s32.totalorder %s181, %s195
      %p197 = scmp.eq.s32.totalorder %s24, 0
      %p198 = por %p196, %p197
      %s200 = sadd.s32 %s199, 1
      %p203 = scmp.eq.s32.totalorder %s18, 2
      %p204 = scmp.ne.s32.totalorder %s199, %s201
      %p205 = scmp.eq.s32.totalorder %s18, 0
      %p206 = por %p204, %p205
      %p207 = scmp.ne.s32.totalorder %s199, %s201
      %p208 = scmp.eq.s32.totalorder %s23, 2
      %p209 = por %p207, %p208
      %p210 = scmp.ne.s32.totalorder %s201, %s202
      %p211 = scmp.eq.s32.totalorder %s23, 0
      %p212 = por %p210, %p211
      %p213 = scmp.ne.s32.totalorder %s201, %s202
      %p214 = scmp.eq.s32.totalorder %s24, 2
      %p215 = por %p213, %p214
      %p217 = scmp.ne.s32.totalorder %s202, %s216
      %p218 = scmp.eq.s32.totalorder %s24, 0
      %p219 = por %p217, %p218
      %s220 = ssub.s32 %s18, %s25
      %p221 = scmp.eq.s32.totalorder %s220, 0
      %s223 = sadd.s32 %s222, 1
      %s224 = scalar_select %p221, %s222, %s223
      %p227 = pneg %p221
      %p228 = scmp.eq.s32.totalorder %s18, 2
      %p229 = por %p227, %p228
      %p230 = scmp.ne.s32.totalorder %s222, %s225
      %p231 = scmp.eq.s32.totalorder %s18, 0
      %p232 = por %p230, %p231
      %p233 = scmp.ne.s32.totalorder %s222, %s225
      %p234 = scmp.eq.s32.totalorder %s23, 2
      %p235 = por %p233, %p234
      %p236 = scmp.ne.s32.totalorder %s225, %s226
      %p237 = scmp.eq.s32.totalorder %s23, 0
      %p238 = por %p236, %p237
      %p239 = scmp.ne.s32.totalorder %s225, %s226
      %p240 = scmp.eq.s32.totalorder %s24, 2
      %p241 = por %p239, %p240
      %p243 = scmp.ne.s32.totalorder %s226, %s242
      %p244 = scmp.eq.s32.totalorder %s24, 0
      %p245 = por %p243, %p244
      %p246 = scmp.le.s32.totalorder 1, %s18
      %p247 = scmp.lt.s32.totalorder %s18, 4
      %p248 = pnand %p246, %p247
      %p249 = pneg %p248
      // Predicated region
      $region9: #{tpu_custom_call.1} parent=5 // pred_check
        _
      $region10: #{tpu_custom_call.1} parent=5 // pred_check_branch
        %251 = sbr.rel (%p248) target = $region12
      $region11: #{tpu_custom_call.1} parent=5 // pred_region
        %s252 = ssub.s32 %s18, 1
        // Predicated region
        $region13: #{tpu_custom_call.1} parent=11 // pred_check
          %p253 = pneg %p65
        $region14: #{tpu_custom_call.1} parent=11 // pred_check_branch
          %255 = sbr.rel (%p253) target = $region16
        $region15: #{tpu_custom_call.1} parent=11 // pred_region
          _
        $region16: #{tpu_custom_call.1} parent=11 // pred_fallthru
          _
        // Predicated region
        $region17: #{tpu_custom_call.1} parent=11 // pred_check
          %p256 = pneg %p86
        $region18: #{tpu_custom_call.1} parent=11 // pred_check_branch
          %258 = sbr.rel (%p256) target = $region20
        $region19: #{tpu_custom_call.1} parent=11 // pred_region
          _
        $region20: #{tpu_custom_call.1} parent=11 // pred_fallthru
          _
        // Predicated region
        $region21: #{tpu_custom_call.1} parent=11 // pred_check
          %p259 = pneg %p107
        $region22: #{tpu_custom_call.1} parent=11 // pred_check_branch
          %261 = sbr.rel (%p259) target = $region24
        $region23: #{tpu_custom_call.1} parent=11 // pred_region
          _
        $region24: #{tpu_custom_call.1} parent=11 // pred_fallthru
          _
        // Predicated region
        $region25: #{tpu_custom_call.1} parent=11 // pred_check
          %p262 = pneg %p128
        $region26: #{tpu_custom_call.1} parent=11 // pred_check_branch
          %264 = sbr.rel (%p262) target = $region28
        $region27: #{tpu_custom_call.1} parent=11 // pred_region
          _
        $region28: #{tpu_custom_call.1} parent=11 // pred_fallthru
          _
        // Predicated region
        $region29: #{tpu_custom_call.1} parent=11 // pred_check
          %p265 = pneg %p149
        $region30: #{tpu_custom_call.1} parent=11 // pred_check_branch
          %267 = sbr.rel (%p265) target = $region32
        $region31: #{tpu_custom_call.1} parent=11 // pred_region
          _
        $region32: #{tpu_custom_call.1} parent=11 // pred_fallthru
          _
        // Predicated region
        $region33: #{tpu_custom_call.1} parent=11 // pred_check
          %p268 = pneg %p170
        $region34: #{tpu_custom_call.1} parent=11 // pred_check_branch
          %270 = sbr.rel (%p268) target = $region36
        $region35: #{tpu_custom_call.1} parent=11 // pred_region
          _
        $region36: #{tpu_custom_call.1} parent=11 // pred_fallthru
          _
        // Predicated region
        $region37: #{tpu_custom_call.1} parent=11 // pred_check
          %p271 = pneg %p191
        $region38: #{tpu_custom_call.1} parent=11 // pred_check_branch
          %273 = sbr.rel (%p271) target = $region40
        $region39: #{tpu_custom_call.1} parent=11 // pred_region
          _
        $region40: #{tpu_custom_call.1} parent=11 // pred_fallthru
          _
        // Predicated region
        $region41: #{tpu_custom_call.1} parent=11 // pred_check
          %p274 = pneg %p212
        $region42: #{tpu_custom_call.1} parent=11 // pred_check_branch
          %276 = sbr.rel (%p274) target = $region44
        $region43: #{tpu_custom_call.1} parent=11 // pred_region
          _
        $region44: #{tpu_custom_call.1} parent=11 // pred_fallthru
          _
      $region12: #{tpu_custom_call.1} parent=5 // pred_fallthru
        _
      %p277 = scmp.lt.s32.totalorder %s18, 3
      // Predicated region
      $region45: #{tpu_custom_call.1} parent=5 // pred_check
        %p278 = pneg %p277
      $region46: #{tpu_custom_call.1} parent=5 // pred_check_branch
        %280 = sbr.rel (%p278) target = $region48
      $region47: #{tpu_custom_call.1} parent=5 // pred_region
        // Predicated region
        $region49: #{tpu_custom_call.1} parent=47 // pred_check
          %p281 = pneg %p38
        $region50: #{tpu_custom_call.1} parent=47 // pred_check_branch
          %283 = sbr.rel (%p281) target = $region52
        $region51: #{tpu_custom_call.1} parent=47 // pred_region
          %p284 = scmp.lt.s32.totalorder %s18, 2
          %s285 = scalar_select %p284, %s18, 2
          %s286 = smul.addr %s285, 8
          %s287 = scalar_lea.vmem %s0, %s286
        $region52: #{tpu_custom_call.1} parent=47 // pred_fallthru
          _
      $region48: #{tpu_custom_call.1} parent=5 // pred_fallthru
        _
      %p288 = scmp.le.s32.totalorder 1, %s18
      %p289 = scmp.lt.s32.totalorder %s18, 4
      %p290 = pnand %p288, %p289
      %p291 = pneg %p290
      // Predicated region
      $region53: #{tpu_custom_call.1} parent=5 // pred_check
        _
      $region54: #{tpu_custom_call.1} parent=5 // pred_check_branch
        %293 = sbr.rel (%p290) target = $region56
      $region55: #{tpu_custom_call.1} parent=5 // pred_region
        %s294 = ssub.s32 %s18, 1
        %p295 = scmp.lt.s32.totalorder %s23, 2
        %s296 = scalar_select %p295, %s23, 2
        %s297 = smul.addr %s296, 8
        %s298 = scalar_lea.vmem %s0, %s297
        %p299 = pneg %p44
        %p300 = pneg %p41
        %p301 = pneg %p65
        %p302 = pneg %p62
        %p303 = pneg %p86
        %p304 = pneg %p83
        %p305 = pneg %p107
        %p306 = pneg %p104
        %p307 = pneg %p128
        %p308 = pneg %p125
        %p309 = pneg %p149
        %p310 = pneg %p146
        %p311 = pneg %p170
        %p312 = pneg %p167
        %p313 = pneg %p191
        %p314 = pneg %p188
        %p315 = pneg %p212
        %p316 = pneg %p209
        %p317 = pneg %p238
        %p318 = pneg %p235
        %s319 = sand.u32 %s225, 1
        %s320 = scalar_lea.sflag [#allocation3], %s319
        %s321 = sand.u32 %s225, 1
        %s322 = smul.addr %s321, 4
        %s323 = scalar_lea.vmem [#allocation2], %s322
        %p324 = scmp.lt.s32.totalorder %s23, 2
        %s325 = scalar_select %p324, %s23, 2
        %s326 = smul.addr %s325, 8
        %s327 = scalar_lea.vmem %s0, %s326
        %v328 = vld [vmem:[%s327] sm:$0x1f]
        %v329 = vld [vmem:[%s1] sm:$0xff]
        %v330 = vld [vmem:[%s1 + $0x8] sm:$0xff]
        %v331 = vld [vmem:[%s1 + $0x10] sm:$0xff]
        %v332 = vld [vmem:[%s1 + $0x18] sm:$0xff]
        %v333 = vld [vmem:[%s2] sm:$0xff]
        %v334 = vld [vmem:[%s2 + $0x8] sm:$0xff]
        %v335 = vld [vmem:[%s2 + $0x10] sm:$0xff]
        %v336 = vld [vmem:[%s2 + $0x18] sm:$0xff]
        %338 = vset.pattern.permute.xlu0 0
        %339 = vperm.xlu0 %338, %v333
        %v340 = vpop.permute.xlu0 %339
        %343 = vset.pattern.permute.xlu0 0
        %344 = vperm.xlu0 %343, %v334
        %v345 = vpop.permute.xlu0 %344
        %348 = vset.pattern.permute.xlu0 0
        %349 = vperm.xlu0 %348, %v335
        %v350 = vpop.permute.xlu0 %349
        %353 = vset.pattern.permute.xlu0 0
        %354 = vperm.xlu0 %353, %v336
        %v355 = vpop.permute.xlu0 %354
        %vm357 = vcmask 39936
        %v359 = vsel %vm357, %v329, 0
        %v362 = vsel %vm357, %v330, 0
        %v365 = vsel %vm357, %v331, 0
        %v368 = vsel %vm357, %v332, 0
        %vm370 = vcmask 1044480
        %v372 = vsel %vm370, %v328, 0
        %374 = vmatpush.msra.mxu0 0.0
        %375 = vmatpush.msra.mxu0 0.0
        %376 = vmatpush.msra.mxu0 0.0
        %377 = vmatpush.msra.mxu0 0.0
        %378 = vmatpush.msra.mxu0 0.0
        %379 = vmatpush.msra.mxu0 0.0
        %380 = vmatpush.msra.mxu0 0.0
        %381 = vmatpush.msra.mxu0 0.0
        %382 = vmatpush.msra.mxu0 0.0
        %383 = vmatpush.msra.mxu0 0.0
        %384 = vmatpush.msra.mxu0 0.0
        %385 = vmatpush.msra.mxu0 0.0
        %386 = vmatpush.msra.mxu0 0.0
        %387 = vmatpush.msra.mxu0 0.0
        %388 = vmatpush.msra.mxu0 0.0
        %389 = vmatpush.msra.mxu0 %v372
        %390 = vmatmul.f32.gmra.mxu0 %v359
        %v391 = vpop.f32.mrf.mxu0
        %v392 = vadd.f32 %v340, %v391
        %393 = vmatmul.f32.gmra.mxu0 %v362
        %v394 = vpop.f32.mrf.mxu0
        %v395 = vadd.f32 %v345, %v394
        %396 = vmatmul.f32.gmra.mxu0 %v365
        %v397 = vpop.f32.mrf.mxu0
        %v398 = vadd.f32 %v350, %v397
        %399 = vmatmul.f32.gmra.mxu0 %v368
        %v400 = vpop.f32.mrf.mxu0
        %v401 = vadd.f32 %v355, %v400
        %402 = vdwg.mxu0
        %v403 = vtanh.pop %v392
        %v404 = vtanh.pop %v395
        %v405 = vtanh.pop %v398
        %v406 = vtanh.pop %v401
        %v407 = vld [vmem:[%s3] sm:$0xff]
        %v408 = vld [vmem:[%s3 + $0x8] sm:$0xff]
        %v409 = vld [vmem:[%s4] sm:$0xff]
        %v410 = vld [vmem:[%s4 + $0x8] sm:$0xff]
        %412 = vset.pattern.permute.xlu0 0
        %413 = vperm.xlu0 %412, %v409
        %v414 = vpop.permute.xlu0 %413
        %417 = vset.pattern.permute.xlu0 0
        %418 = vperm.xlu0 %417, %v410
        %v419 = vpop.permute.xlu0 %418
        %vm421 = vcmask 261120
        %v423 = vsel %vm421, %v407, 0
        %v426 = vsel %vm421, %v408, 0
        %428 = vmatpush.msra.mxu0 0.0
        %429 = vmatpush.msra.mxu0 0.0
        %430 = vmatpush.msra.mxu0 0.0
        %431 = vmatpush.msra.mxu0 0.0
        %432 = vmatpush.msra.mxu0 0.0
        %433 = vmatpush.msra.mxu0 0.0
        %434 = vmatpush.msra.mxu0 0.0
        %435 = vmatpush.msra.mxu0 0.0
        %436 = vmatpush.msra.mxu0 0.0
        %437 = vmatpush.msra.mxu0 0.0
        %438 = vmatpush.msra.mxu0 0.0
        %439 = vmatpush.msra.mxu0 0.0
        %440 = vmatpush.msra.mxu0 %v406
        %441 = vmatpush.msra.mxu0 %v405
        %442 = vmatpush.msra.mxu0 %v404
        %443 = vmatpush.msra.mxu0 %v403
        %444 = vmatmul.f32.gmra.mxu0 %v423
        %v445 = vpop.f32.mrf.mxu0
        %v446 = vadd.f32 %v414, %v445
        %447 = vmatmul.f32.gmra.mxu0 %v426
        %v448 = vpop.f32.mrf.mxu0
        %v449 = vadd.f32 %v419, %v448
        %450 = vdwg.mxu0
        %v451 = vtanh.pop %v446
        %v452 = vtanh.pop %v449
        %v453 = vld [vmem:[%s5] sm:$0xff]
        %v454 = vld [vmem:[%s6] sm:$0xff]
        %456 = vset.pattern.permute.xlu0 0
        %457 = vperm.xlu0 %456, %v454
        %v458 = vpop.permute.xlu0 %457
        %vm460 = vcmask 130048
        %v462 = vsel %vm460, %v453, 0
        %464 = vmatpush.msra.mxu0 0.0
        %465 = vmatpush.msra.mxu0 0.0
        %466 = vmatpush.msra.mxu0 0.0
        %467 = vmatpush.msra.mxu0 0.0
        %468 = vmatpush.msra.mxu0 0.0
        %469 = vmatpush.msra.mxu0 0.0
        %470 = vmatpush.msra.mxu0 0.0
        %471 = vmatpush.msra.mxu0 0.0
        %472 = vmatpush.msra.mxu0 0.0
        %473 = vmatpush.msra.mxu0 0.0
        %474 = vmatpush.msra.mxu0 0.0
        %475 = vmatpush.msra.mxu0 0.0
        %476 = vmatpush.msra.mxu0 0.0
        %477 = vmatpush.msra.mxu0 0.0
        %478 = vmatpush.msra.mxu0 %v452
        %479 = vmatpush.msra.mxu0 %v451
        %480 = vmatmul.f32.gmra.mxu0 %v462
        %v481 = vpop.f32.mrf.mxu0
        %v482 = vadd.f32 %v458, %v481
        %483 = vdwg.mxu0
        %v484 = vtanh.pop %v482
        %v485 = vld [vmem:[%s7] sm:$0xf]
        %v486 = vld [vmem:[%s8] sm:$0xf]
        %488 = vset.pattern.permute.xlu0 0
        %489 = vperm.xlu0 %488, %v486
        %v490 = vpop.permute.xlu0 %489
        %vm492 = vcmask 64512
        %v494 = vsel %vm492, %v485, 0
        %496 = vmatpush.msra.mxu0 0.0
        %497 = vmatpush.msra.mxu0 0.0
        %498 = vmatpush.msra.mxu0 0.0
        %499 = vmatpush.msra.mxu0 0.0
        %500 = vmatpush.msra.mxu0 0.0
        %501 = vmatpush.msra.mxu0 0.0
        %502 = vmatpush.msra.mxu0 0.0
        %503 = vmatpush.msra.mxu0 0.0
        %504 = vmatpush.msra.mxu0 0.0
        %505 = vmatpush.msra.mxu0 0.0
        %506 = vmatpush.msra.mxu0 0.0
        %507 = vmatpush.msra.mxu0 0.0
        %508 = vmatpush.msra.mxu0 0.0
        %509 = vmatpush.msra.mxu0 0.0
        %510 = vmatpush.msra.mxu0 0.0
        %511 = vmatpush.msra.mxu0 %v484
        %512 = vmatmul.f32.gmra.mxu0 %v494
        %v513 = vpop.f32.mrf.mxu0
        %v514 = vadd.f32 %v490, %v513
        %515 = vdwg.mxu0
        %516 = vst [vmem:[%s323] sm:$0xf] %v514
        %s517 = sand.u32 %s225, 1
        %s518 = scalar_lea.sflag [#allocation3], %s517
        %s519 = sand.u32 %s225, 1
        %s520 = smul.addr %s519, 4
        %s521 = scalar_lea.vmem [#allocation2], %s520
        // Predicated region
        $region57: #{tpu_custom_call.1} parent=55 // pred_check
          %p522 = pneg %p235
        $region58: #{tpu_custom_call.1} parent=55 // pred_check_branch
          %524 = sbr.rel (%p522) target = $region60
        $region59: #{tpu_custom_call.1} parent=55 // pred_region
          %526 = vsyncadd %s518, 0
          %s527 = smul.addr %s23, 4
          %s528 = scalar_lea.hbm %s9, %s527
          %s530 = sshll.u32 %s521, 4
          %s531 = int_to_ptr.vmem [resolvable:$true] %s530
          %s532 = sshll.u32 %s528, 4
          %s533 = int_to_ptr.hbm [resolvable:$true] %s532
          %535 = dma.vmem_to_hbm [thread:$0]  %s531, 64, %s533, %s518
        $region60: #{tpu_custom_call.1} parent=55 // pred_fallthru
          _
      $region56: #{tpu_custom_call.1} parent=5 // pred_fallthru
        _
      %p536 = scmp.le.s32.totalorder 2, %s18
      // Predicated region
      $region61: #{tpu_custom_call.1} parent=5 // pred_check
        %p537 = pneg %p536
      $region62: #{tpu_custom_call.1} parent=5 // pred_check_branch
        %539 = sbr.rel (%p537) target = $region64
      $region63: #{tpu_custom_call.1} parent=5 // pred_region
        %s540 = ssub.s32 %s18, 2
        // Predicated region
        $region65: #{tpu_custom_call.1} parent=63 // pred_check
          %p541 = pneg %p241
        $region66: #{tpu_custom_call.1} parent=63 // pred_check_branch
          %543 = sbr.rel (%p541) target = $region68
        $region67: #{tpu_custom_call.1} parent=63 // pred_region
          %s544 = sand.u32 %s226, 1
          %s545 = scalar_lea.sflag [#allocation3], %s544
          %s546 = sand.u32 %s226, 1
          %s547 = smul.addr %s546, 4
          %s548 = scalar_lea.vmem [#allocation2], %s547
          %550 = dma.done %s545, 64
        $region68: #{tpu_custom_call.1} parent=63 // pred_fallthru
          _
      $region64: #{tpu_custom_call.1} parent=5 // pred_fallthru
        _
    $region6: #{tpu_custom_call.1} parent=1 // loop_footer
      %s22 = sadd.s32 1, %s18
    $region7: #{tpu_custom_call.1} parent=1 // loop_footer_branch
      %17 = sbr.rel target = $region3
    $region8: #{tpu_custom_call.1} parent=1 // loop_exit
      _
    %551 = vsyncpa [#allocation3], 1
    %s552 = scalar_lea.sflag [#allocation3], 1
    %553 = vsyncpa %s552, 1

</llo_original>
